<compile_context>
chip_gen: v7x
topology: tpu7x:2x2x1
jax: 0.10.0
libtpu: 0.0.40
codegen_flags: <defaults>
</compile_context>

<pallas_src>
import functools

import jax
import jax.numpy as jnp
from jax.experimental import pallas as pl
from jax.experimental.pallas import tpu as pltpu

_LANES = 128
_SUBLANES = 8
_MAX_TILE_ROWS = 1024  # 1024 x 128 x 4B = 512 KiB per input block


def _iou_kernel(x_ref, t_ref, inter_ref, total_ref, *, n_valid, tile_rows, needs_mask):
    """Accumulate per-lane partial sums of sigmoid(x)*t and sigmoid(x)+t."""
    step = pl.program_id(0)

    @pl.when(step == 0)
    def _init():
        inter_ref[...] = jnp.zeros_like(inter_ref)
        total_ref[...] = jnp.zeros_like(total_ref)

    s = jax.nn.sigmoid(x_ref[...].astype(jnp.float32))
    t = t_ref[...].astype(jnp.float32)

    if needs_mask:
        # Mask out padded elements / the ragged boundary block by global
        # element index (static threshold, traced step).
        row = jax.lax.broadcasted_iota(jnp.int32, (tile_rows, _LANES), 0)
        lane = jax.lax.broadcasted_iota(jnp.int32, (tile_rows, _LANES), 1)
        gidx = (step * tile_rows + row) * _LANES + lane
        valid = gidx < n_valid
        s = jnp.where(valid, s, 0.0)
        t = jnp.where(valid, t, 0.0)

    # Fold the (tile_rows, 128) block onto the resident (8, 128) accumulators.
    # The reshape splits the sublane axis on an (8, 128) tile boundary (free);
    # the axis-0 sum is pure VPU vreg adds -- no XLU work in the hot loop.
    inter_ref[...] += (s * t).reshape(-1, _SUBLANES, _LANES).sum(axis=0)
    total_ref[...] += (s + t).reshape(-1, _SUBLANES, _LANES).sum(axis=0)


def iou_loss(inputs, targets, smooth=1.0):
    """Pallas equivalent of IoULoss.forward."""
    x = jnp.ravel(inputs)
    t = jnp.ravel(targets)
    n = x.shape[0]

    # Only pad when the flat size is not a multiple of 8*128 (the minimal
    # tileable unit).  Padded elements are masked in-kernel, so the pad value
    # is irrelevant, and for typical NCHW sizes this branch never fires.
    min_block = _SUBLANES * _LANES
    n_pad = pl.cdiv(n, min_block) * min_block
    if n_pad != n:
        x = jnp.pad(x, (0, n_pad - n))
        t = jnp.pad(t, (0, n_pad - n))

    rows = n_pad // _LANES
    tile_rows = min(_MAX_TILE_ROWS, rows)  # rows is a multiple of 8
    grid_steps = pl.cdiv(rows, tile_rows)
    needs_mask = (grid_steps * tile_rows * _LANES) != n

    x2 = x.reshape(rows, _LANES)
    t2 = t.reshape(rows, _LANES)

    kernel = functools.partial(
        _iou_kernel, n_valid=n, tile_rows=tile_rows, needs_mask=needs_mask
    )

    acc_spec = pl.BlockSpec((_SUBLANES, _LANES), lambda i: (0, 0))
    inter_part, total_part = pl.pallas_call(
        kernel,
        out_shape=(
            jax.ShapeDtypeStruct((_SUBLANES, _LANES), jnp.float32),
            jax.ShapeDtypeStruct((_SUBLANES, _LANES), jnp.float32),
        ),
        grid_spec=pltpu.PrefetchScalarGridSpec(
            num_scalar_prefetch=0,
            grid=(grid_steps,),
            in_specs=[
                pl.BlockSpec((tile_rows, _LANES), lambda i: (i, 0)),
                pl.BlockSpec((tile_rows, _LANES), lambda i: (i, 0)),
            ],
            out_specs=(acc_spec, acc_spec),
        ),
        compiler_params=pltpu.CompilerParams(
            dimension_semantics=("arbitrary",),
        ),
        cost_estimate=pl.CostEstimate(
            flops=6 * n,
            transcendentals=n,  # one exp per element for the sigmoid
            bytes_accessed=int(x2.nbytes) + int(t2.nbytes) + 2 * _SUBLANES * _LANES * 4,
        ),
    )(x2, t2)

    intersection = jnp.sum(inter_part)
    total = jnp.sum(total_part)
    union = total - intersection
    return 1.0 - (intersection + smooth) / (union + smooth)


def _reference(inputs, targets, smooth=1.0):
    s = jax.nn.sigmoid(inputs.astype(jnp.float32)).ravel()
    t = targets.astype(jnp.float32).ravel()
    intersection = jnp.sum(s * t)
    total = jnp.sum(s + t)
    union = total - intersection
    return 1.0 - (intersection + smooth) / (union + smooth)


if __name__ == "__main__":
    key = jax.random.PRNGKey(0)
    k1, k2 = jax.random.split(key)
    # NCHW logits and binary mask targets, as the YOLO segmentation loss uses.
    inputs = jax.random.normal(k1, (2, 4, 16, 16), dtype=jnp.float32)
    targets = (jax.random.uniform(k2, (2, 4, 16, 16)) > 0.5).astype(jnp.float32)

    loss = jax.block_until_ready(iou_loss(inputs, targets))
    ref = jax.block_until_ready(_reference(inputs, targets))
    assert jnp.allclose(loss, ref, rtol=1e-5, atol=1e-5), (loss, ref)

    # Also exercise the ragged / masked path once (non-lane-aligned size).
    k3, k4 = jax.random.split(k1)
    xi = jax.random.normal(k3, (3, 5, 7), dtype=jnp.float32)
    ti = (jax.random.uniform(k4, (3, 5, 7)) > 0.5).astype(jnp.float32)
    loss2 = jax.block_until_ready(iou_loss(xi, ti))
    ref2 = jax.block_until_ready(_reference(xi, ti))
    assert jnp.allclose(loss2, ref2, rtol=1e-5, atol=1e-5), (loss2, ref2)

    print("KERNEL_OK")
</pallas_src>

<mosaic_0001>
module attributes {stable_mosaic.version = 11 : i64} {
  func.func @_iou_kernel(%arg0: i32, %arg1: memref<16x128xf32, #tpu.memory_space<vmem>>, %arg2: memref<16x128xf32, #tpu.memory_space<vmem>>, %arg3: memref<8x128xf32, #tpu.memory_space<vmem>>, %arg4: memref<8x128xf32, #tpu.memory_space<vmem>>) attributes {dimension_semantics = [#tpu.dimension_semantics<arbitrary>], iteration_bounds = array<i64: 1>, scalar_prefetch = 0 : i64, scratch_operands = 0 : i64, tpu.core_type = #tpu.core_type<tc>, window_params = [{transform_indices = @transform_0, window_bounds = array<i64: 16, 128>}, {transform_indices = @transform_1, window_bounds = array<i64: 16, 128>}, {pipeline_mode = #tpu.pipeline_mode<synchronous>, transform_indices = @transform_2, window_bounds = array<i64: 8, 128>}, {pipeline_mode = #tpu.pipeline_mode<synchronous>, transform_indices = @transform_3, window_bounds = array<i64: 8, 128>}]} {
    %c0_i32 = arith.constant 0 : i32
    %0 = arith.cmpi eq, %arg0, %c0_i32 : i32
    %1 = arith.extui %0 : i1 to i32
    %c0_i32_0 = arith.constant 0 : i32
    %2 = arith.cmpi ne, %1, %c0_i32_0 : i32
    scf.if %2 {
      %cst_14 = arith.constant 0.000000e+00 : f32
      %22 = vector.broadcast %cst_14 : f32 to vector<8x128xf32>
      %c0_15 = arith.constant 0 : index
      %c0_16 = arith.constant 0 : index
      %23 = vector.load %arg3[%c0_15, %c0_16] : memref<8x128xf32, #tpu.memory_space<vmem>>, vector<8x128xf32>
      tpu.vector_store %arg3[%c0_15, %c0_16], %22 {strides = array<i32>} : memref<8x128xf32, #tpu.memory_space<vmem>>, vector<8x128xf32>,
      %cst_17 = arith.constant 0.000000e+00 : f32
      %24 = vector.broadcast %cst_17 : f32 to vector<8x128xf32>
      %c0_18 = arith.constant 0 : index
      %c0_19 = arith.constant 0 : index
      %25 = vector.load %arg4[%c0_18, %c0_19] : memref<8x128xf32, #tpu.memory_space<vmem>>, vector<8x128xf32>
      tpu.vector_store %arg4[%c0_18, %c0_19], %24 {strides = array<i32>} : memref<8x128xf32, #tpu.memory_space<vmem>>, vector<8x128xf32>,
    } else {
    }
    %c0 = arith.constant 0 : index
    %c0_1 = arith.constant 0 : index
    %3 = vector.load %arg1[%c0, %c0_1] : memref<16x128xf32, #tpu.memory_space<vmem>>, vector<16x128xf32>
    %4 = arith.negf %3 : vector<16x128xf32>
    %5 = math.exp %4 : vector<16x128xf32>
    %cst = arith.constant 1.000000e+00 : f32
    %6 = vector.broadcast %cst : f32 to vector<16x128xf32>
    %7 = arith.addf %6, %5 : vector<16x128xf32>
    %8 = arith.divf %6, %7 : vector<16x128xf32>
    %c0_2 = arith.constant 0 : index
    %c0_3 = arith.constant 0 : index
    %9 = vector.load %arg2[%c0_2, %c0_3] : memref<16x128xf32, #tpu.memory_space<vmem>>, vector<16x128xf32>
    %c0_4 = arith.constant 0 : index
    %c0_5 = arith.constant 0 : index
    %10 = vector.load %arg3[%c0_4, %c0_5] : memref<8x128xf32, #tpu.memory_space<vmem>>, vector<8x128xf32>
    %11 = arith.mulf %8, %9 : vector<16x128xf32>
    %12 = vector.shape_cast %11 : vector<16x128xf32> to vector<2x8x128xf32>
    %cst_6 = arith.constant dense<0.000000e+00> : vector<8x128xf32>
    %13 = vector.multi_reduction <add>, %12, %cst_6 [0] : vector<2x8x128xf32> to vector<8x128xf32>
    %14 = arith.addf %10, %13 : vector<8x128xf32>
    %c0_7 = arith.constant 0 : index
    %c0_8 = arith.constant 0 : index
    %15 = vector.load %arg3[%c0_7, %c0_8] : memref<8x128xf32, #tpu.memory_space<vmem>>, vector<8x128xf32>
    tpu.vector_store %arg3[%c0_7, %c0_8], %14 {strides = array<i32>} : memref<8x128xf32, #tpu.memory_space<vmem>>, vector<8x128xf32>,
    %c0_9 = arith.constant 0 : index
    %c0_10 = arith.constant 0 : index
    %16 = vector.load %arg4[%c0_9, %c0_10] : memref<8x128xf32, #tpu.memory_space<vmem>>, vector<8x128xf32>
    %17 = arith.addf %8, %9 : vector<16x128xf32>
    %18 = vector.shape_cast %17 : vector<16x128xf32> to vector<2x8x128xf32>
    %cst_11 = arith.constant dense<0.000000e+00> : vector<8x128xf32>
    %19 = vector.multi_reduction <add>, %18, %cst_11 [0] : vector<2x8x128xf32> to vector<8x128xf32>
    %20 = arith.addf %16, %19 : vector<8x128xf32>
    %c0_12 = arith.constant 0 : index
    %c0_13 = arith.constant 0 : index
    %21 = vector.load %arg4[%c0_12, %c0_13] : memref<8x128xf32, #tpu.memory_space<vmem>>, vector<8x128xf32>
    tpu.vector_store %arg4[%c0_12, %c0_13], %20 {strides = array<i32>} : memref<8x128xf32, #tpu.memory_space<vmem>>, vector<8x128xf32>,
    return
  }
  func.func @transform_0(%arg0: i32) -> (i32, i32) {
    %c0_i32 = arith.constant 0 : i32
    %c0_i32_0 = arith.constant 0 : i32
    return %arg0, %c0_i32 : i32, i32
  }
  func.func @transform_1(%arg0: i32) -> (i32, i32) {
    %c0_i32 = arith.constant 0 : i32
    %c0_i32_0 = arith.constant 0 : i32
    return %arg0, %c0_i32 : i32, i32
  }
  func.func @transform_2(%arg0: i32) -> (i32, i32) {
    %c0_i32 = arith.constant 0 : i32
    %c0_i32_0 = arith.constant 0 : i32
    %c0_i32_1 = arith.constant 0 : i32
    return %c0_i32, %c0_i32_0 : i32, i32
  }
  func.func @transform_3(%arg0: i32) -> (i32, i32) {
    %c0_i32 = arith.constant 0 : i32
    %c0_i32_0 = arith.constant 0 : i32
    %c0_i32_1 = arith.constant 0 : i32
    return %c0_i32, %c0_i32_0 : i32, i32
  }
}

</mosaic_0001>

<llo_original>
// kernel: tpu_custom_call.1
$region0: #{tpu_custom_call.1}
  #allocation0 [shape = 'u32[]', space=smem, size = 0x4, offset = 0x4, fixed_abs, tag = 'smem constant byte address 0x4 - core index']
  #allocation1 [shape = 'u32[144,128]{1,0:T(1,128)}', space=vmem, size = 0x12000, scoped, tag = 'internal scratch']
  %s0 = inlined_call_operand.hbm [shape: f32[16,128], index: 0, kind: input, shape index: {}]
  %s1 = inlined_call_operand.hbm [shape: f32[16,128], index: 1, kind: input, shape index: {}]
  %s2 = inlined_call_operand.hbm [shape: f32[8,128], index: 2, kind: output, shape index: {0}]
  %s3 = inlined_call_operand.hbm [shape: f32[8,128], index: 3, kind: output, shape index: {1}]
  %4 = xla_tuple %s2, %s3
  %s5 = sld [smem:[#allocation0]]
  $region38: #{tpu_custom_call.1} parent=0
    _
  %s7 = ssub.s32 1, %s5
  %s8 = scalar_select 0, %s7, %s5
  $region1: #{tpu_custom_call.1} parent=0
    #allocation2 [shape = 'u8[8192]{0}', space=vmem, size = 0x2000, scoped, tag = 'input window, operand 0, single buffered']
    #allocation3 [shape = 's32[1]{0}', space=sflag, size = 0x4, scoped, tag = 'scoped memory for tpu_custom_call.1']
    #allocation4 [shape = 's32[1]{0}', space=sflag, size = 0x4, scoped, tag = 'scoped memory for tpu_custom_call.1']
    #allocation5 [shape = 'u8[8192]{0}', space=vmem, size = 0x2000, scoped, tag = 'input window, operand 1, single buffered']
    #allocation6 [shape = 's32[1]{0}', space=sflag, size = 0x4, scoped, tag = 'scoped memory for tpu_custom_call.1']
    #allocation7 [shape = 'u8[4096]{0}', space=vmem, size = 0x1000, scoped, tag = 'output window, operand 0, single buffered']
    #allocation8 [shape = 'u8[4096]{0}', space=vmem, size = 0x1000, scoped, tag = 'output window, operand 1, single buffered']
    #allocation9 [shape = 's32[1]{0}', space=sflag, size = 0x4, scoped, tag = 'scoped memory for tpu_custom_call.1']
    %9 = vsyncpa [#allocation3], 0
    %10 = vsyncpa [#allocation6], 0
    %11 = vsyncpa [#allocation4], 0
    %12 = vsyncpa [#allocation9], 0
    // Predicated region
    $region2: #{tpu_custom_call.1} parent=1 // pred_check
      _
    $region3: #{tpu_custom_call.1} parent=1 // pred_check_branch
      %14 = sbr.rel (0) target = $region5
    $region4: #{tpu_custom_call.1} parent=1 // pred_region
      %s16 = ssub.s32 256, 256
      %17 = vsyncadd [#allocation3], %s16
      %s18 = sshll.u32 [#allocation2], 4
      %s19 = int_to_ptr.vmem [resolvable:$true] %s18
      %24 = dma.hbm_to_vmem [thread:$0]  %s0, 256, %s19, [#allocation3], 128, 128, 8
    $region5: #{tpu_custom_call.1} parent=1 // pred_fallthru
      _
    // Predicated region
    $region6: #{tpu_custom_call.1} parent=1 // pred_check
      _
    $region7: #{tpu_custom_call.1} parent=1 // pred_check_branch
      %26 = sbr.rel (0) target = $region9
    $region8: #{tpu_custom_call.1} parent=1 // pred_region
      %s28 = ssub.s32 256, 256
      %29 = vsyncadd [#allocation6], %s28
      %s30 = sshll.u32 [#allocation5], 4
      %s31 = int_to_ptr.vmem [resolvable:$true] %s30
      %36 = dma.hbm_to_vmem [thread:$0]  %s1, 256, %s31, [#allocation6], 128, 128, 8
    $region9: #{tpu_custom_call.1} parent=1 // pred_fallthru
      _
    // Predicated region
    $region10: #{tpu_custom_call.1} parent=1 // pred_check
      _
    $region11: #{tpu_custom_call.1} parent=1 // pred_check_branch
      %38 = sbr.rel (0) target = $region13
    $region12: #{tpu_custom_call.1} parent=1 // pred_region
      %39 = dma.done [#allocation3], 256
    $region13: #{tpu_custom_call.1} parent=1 // pred_fallthru
      _
    // Predicated region
    $region14: #{tpu_custom_call.1} parent=1 // pred_check
      _
    $region15: #{tpu_custom_call.1} parent=1 // pred_check_branch
      %41 = sbr.rel (0) target = $region17
    $region16: #{tpu_custom_call.1} parent=1 // pred_region
      %42 = dma.done [#allocation6], 256
    $region17: #{tpu_custom_call.1} parent=1 // pred_fallthru
      _
    %p43 = scmp.eq.s32.totalorder 0, 0
    // Predicated region
    $region18: #{tpu_custom_call.1} parent=1 // pred_check
      %p44 = pneg %p43
    $region19: #{tpu_custom_call.1} parent=1 // pred_check_branch
      %46 = sbr.rel (%p44) target = $region21
    $region20: #{tpu_custom_call.1} parent=1 // pred_region
      %47 = vst [vmem:[#allocation7] sm:$0xff] 0.0
      %48 = vst [vmem:[#allocation8] sm:$0xff] 0.0
    $region21: #{tpu_custom_call.1} parent=1 // pred_fallthru
      _
    %v49 = vld [vmem:[#allocation2] sm:$0xff]
    %v50 = vld [vmem:[#allocation2 + $0x8] sm:$0xff]
    %v51 = vxor.u32 %v49, 2147483648
    %v52 = vxor.u32 %v50, 2147483648
    %v53 = vmul.f32 %v51, 1.442695
    %v54 = vpow.pop %v53
    %v55 = vmul.f32 %v52, 1.442695
    %v56 = vpow.pop %v55
    %v57 = vadd.f32 %v54, 1.0
    %v58 = vadd.f32 %v56, 1.0
    %v59 = vrcp.pop %v57
    %v60 = vmul.f32 1.0, %v59
    %v61 = vrcp.pop %v58
    %v62 = vmul.f32 1.0, %v61
    %v63 = vld [vmem:[#allocation5] sm:$0xff]
    %v64 = vld [vmem:[#allocation5 + $0x8] sm:$0xff]
    %v65 = vld [vmem:[#allocation7] sm:$0xff]
    %v66 = vmul.f32 %v60, %v63
    %v67 = vmul.f32 %v62, %v64
    %v68 = vadd.f32 %v66, %v67
    %v69 = vadd.f32 %v65, %v68
    %70 = vst [vmem:[#allocation7] sm:$0xff] %v69
    %v71 = vld [vmem:[#allocation8] sm:$0xff]
    %v72 = vadd.f32 %v60, %v63
    %v73 = vadd.f32 %v62, %v64
    %v74 = vadd.f32 %v72, %v73
    %v75 = vadd.f32 %v71, %v74
    %76 = vst [vmem:[#allocation8] sm:$0xff] %v75
    // Predicated region
    $region22: #{tpu_custom_call.1} parent=1 // pred_check
      _
    $region23: #{tpu_custom_call.1} parent=1 // pred_check_branch
      %78 = sbr.rel (0) target = $region25
    $region24: #{tpu_custom_call.1} parent=1 // pred_region
      %s80 = ssub.s32 128, 128
      %81 = vsyncadd [#allocation4], %s80
      %s83 = sshll.u32 [#allocation7], 4
      %s84 = int_to_ptr.vmem [resolvable:$true] %s83
      %86 = dma.vmem_to_hbm [thread:$0]  %s84, 128, %s2, [#allocation4]
    $region25: #{tpu_custom_call.1} parent=1 // pred_fallthru
      _
    // Predicated region
    $region26: #{tpu_custom_call.1} parent=1 // pred_check
      _
    $region27: #{tpu_custom_call.1} parent=1 // pred_check_branch
      %88 = sbr.rel (0) target = $region29
    $region28: #{tpu_custom_call.1} parent=1 // pred_region
      %s90 = ssub.s32 128, 128
      %91 = vsyncadd [#allocation9], %s90
      %s93 = sshll.u32 [#allocation8], 4
      %s94 = int_to_ptr.vmem [resolvable:$true] %s93
      %96 = dma.vmem_to_hbm [thread:$0]  %s94, 128, %s3, [#allocation9]
    $region29: #{tpu_custom_call.1} parent=1 // pred_fallthru
      _
    // Predicated region
    $region30: #{tpu_custom_call.1} parent=1 // pred_check
      _
    $region31: #{tpu_custom_call.1} parent=1 // pred_check_branch
      %98 = sbr.rel (0) target = $region33
    $region32: #{tpu_custom_call.1} parent=1 // pred_region
      %99 = dma.done [#allocation4], 128
    $region33: #{tpu_custom_call.1} parent=1 // pred_fallthru
      _
    // Predicated region
    $region34: #{tpu_custom_call.1} parent=1 // pred_check
      _
    $region35: #{tpu_custom_call.1} parent=1 // pred_check_branch
      %101 = sbr.rel (0) target = $region37
    $region36: #{tpu_custom_call.1} parent=1 // pred_region
      %102 = dma.done [#allocation9], 128
    $region37: #{tpu_custom_call.1} parent=1 // pred_fallthru
      _
    %103 = vsyncpa [#allocation3], 1
    %104 = vsyncpa [#allocation6], 1
    %105 = vsyncpa [#allocation4], 1
    %106 = vsyncpa [#allocation9], 1

</llo_original>
